<compile_context>
chip_gen: v7x
topology: tpu7x:2x2x1
jax: 0.10.0
libtpu: 0.0.40
codegen_flags: <defaults>
</compile_context>

<pallas_src>
import jax
import jax.numpy as jnp
from jax.experimental import pallas as pl
from jax.experimental.pallas import tpu as pltpu

LANE = 128  # TPU lane width


def _round_up(n, m):
    return ((n + m - 1) // m) * m


def _mish(z):
    # mish(z) = z * tanh(softplus(z)); with t = e^z*(e^z+2):
    #   tanh(log1p(e^z)) = t / (t + 2)
    # Single exp (EUP) + approximate reciprocal (EUP) instead of exp+log1p+tanh.
    e = jnp.exp(jnp.minimum(z, 20.0))
    t = e * (e + 2.0)
    y = z * t * pl.reciprocal(t + 2.0, approx=True)
    return jnp.where(z > 20.0, z, y)  # large-z bypass, matches F.mish/F.softplus


def _mlp_kernel(x_ref, w1_ref, b1_ref, w2_ref, b2_ref, w3_ref, b3_ref, o_ref):
    # x tile arrives f32 with its natural (unpadded) feature dim; cast to bf16
    # on the VPU so all three matmuls run bf16 x bf16 with f32 MXU accumulation.
    x = x_ref[...].astype(jnp.bfloat16)

    h1 = jnp.dot(x, w1_ref[...], preferred_element_type=jnp.float32) + b1_ref[...]
    h1 = _mish(h1).astype(jnp.bfloat16)          # elementwise stays f32, cast for MXU

    h2 = jnp.dot(h1, w2_ref[...], preferred_element_type=jnp.float32) + b2_ref[...]
    h2 = _mish(h2).astype(jnp.bfloat16)

    # Lane-dense (act_p = multiple of 128) bf16 store; f32 restored outside on
    # the tiny sliced result.
    o_ref[...] = (
        jnp.dot(h2, w3_ref[...], preferred_element_type=jnp.float32) + b3_ref[...]
    ).astype(o_ref.dtype)


def init_params(key, obs_dim, action_dim, hidden_size):
    """Logical f32 params, stored transposed vs nn.Linear so y = x @ W + b."""
    ks = jax.random.split(key, 6)

    def lin(kw, kb, fan_in, fan_out):
        bound = 1.0 / jnp.sqrt(fan_in)
        w = jax.random.uniform(kw, (fan_in, fan_out), jnp.float32, -bound, bound)
        b = jax.random.uniform(kb, (1, fan_out), jnp.float32, -bound, bound)
        return w, b

    w1, b1 = lin(ks[0], ks[1], obs_dim, hidden_size)
    w2, b2 = lin(ks[2], ks[3], hidden_size, hidden_size)
    w3, b3 = lin(ks[4], ks[5], hidden_size, action_dim)
    return {"w1": w1, "b1": b1, "w2": w2, "b2": b2, "w3": w3, "b3": b3}


def prepare_params(params):
    """One-time: zero-pad *output/hidden* feature dims to multiples of 128 and
    cast weights to bf16.  w1's input dim is left at obs_dim (Mosaic pads the
    short K contraction in-register), so x needs no feature padding.

    Zero padding is exact: mish(0) == 0, so padded hidden features contribute
    nothing downstream (w2/w3 rows for those features are zero as well).
    """
    obs_dim, hidden = params["w1"].shape
    action_dim = params["w3"].shape[1]
    hid_p = _round_up(hidden, LANE)
    act_p = _round_up(action_dim, LANE)

    def pad_w(w, rows, cols):
        wp = jnp.zeros((rows, cols), jnp.float32)
        wp = wp.at[: w.shape[0], : w.shape[1]].set(w)
        return wp.astype(jnp.bfloat16)

    def pad_b(b, cols):
        bp = jnp.zeros((1, cols), jnp.float32)
        return bp.at[:, : b.shape[1]].set(b)  # bias kept f32 (added to f32 acc)

    return {
        "w1": pad_w(params["w1"], obs_dim, hid_p),   # input dim NOT padded
        "b1": pad_b(params["b1"], hid_p),
        "w2": pad_w(params["w2"], hid_p, hid_p),
        "b2": pad_b(params["b2"], hid_p),
        "w3": pad_w(params["w3"], hid_p, act_p),
        "b3": pad_b(params["b3"], act_p),
        "obs_dim": obs_dim,
        "action_dim": action_dim,
    }


def network_forward(x, kparams, *, block_batch=2048):
    """x: (B, obs_dim) f32.  kparams: output of prepare_params().  Returns f32."""
    w1, b1 = kparams["w1"], kparams["b1"]
    w2, b2 = kparams["w2"], kparams["b2"]
    w3, b3 = kparams["w3"], kparams["b3"]
    obs_dim, action_dim = kparams["obs_dim"], kparams["action_dim"]
    hid_p = w1.shape[1]
    act_p = w3.shape[1]

    B = x.shape[0]
    # bf16 sublane pack is 16 rows -> keep all batch tiles 16-aligned.
    b_aligned = _round_up(B, 16)
    if b_aligned >= 32:
        # Cap the tile at half the batch so grid >= 2 and the "parallel" batch
        # axis can be split across v7x's two TensorCores (no-op on v5e/v6e).
        tb = min(block_batch, _round_up(pl.cdiv(b_aligned, 2), 16))
    else:
        tb = b_aligned
    b_pad = _round_up(b_aligned, tb)

    # Pad only the batch dim (cheap: feature dim stays obs_dim, dtype stays f32).
    # Padded rows compute mish(bias) garbage that is sliced off below.
    if b_pad != B:
        x_in = jnp.zeros((b_pad, obs_dim), x.dtype).at[:B].set(x)
    else:
        x_in = x

    const = lambda i: (0, 0)                    # weights/biases resident across steps
    out = pl.pallas_call(
        _mlp_kernel,
        out_shape=jax.ShapeDtypeStruct((b_pad, act_p), jnp.bfloat16),
        grid=(b_pad // tb,),
        in_specs=[
            pl.BlockSpec((tb, obs_dim), lambda i: (i, 0)),  # full-extent minor dim
            pl.BlockSpec((obs_dim, hid_p), const),
            pl.BlockSpec((1, hid_p), const),
            pl.BlockSpec((hid_p, hid_p), const),
            pl.BlockSpec((1, hid_p), const),
            pl.BlockSpec((hid_p, act_p), const),
            pl.BlockSpec((1, act_p), const),
        ],
        out_specs=pl.BlockSpec((tb, act_p), lambda i: (i, 0)),
        compiler_params=pltpu.CompilerParams(
            dimension_semantics=("parallel",),      # megacore-split batch on v7x
            vmem_limit_bytes=32 * 1024 * 1024,      # explicit for v5e's 16 MiB default
        ),
    )(x_in, w1, b1, w2, b2, w3, b3)

    # Slice off batch/lane padding; restore f32 on the tiny useful result.
    return out[:B, :action_dim].astype(jnp.float32)


def network_forward_ref(x, params):
    """Pure-JAX f32 reference using the canonical softplus+tanh mish."""
    def mish(z):
        sp = jnp.where(z > 20.0, z, jnp.log1p(jnp.exp(jnp.minimum(z, 20.0))))
        return z * jnp.tanh(sp)

    h = mish(x @ params["w1"] + params["b1"])
    h = mish(h @ params["w2"] + params["b2"])
    return h @ params["w3"] + params["b3"]


if __name__ == "__main__":
    key = jax.random.PRNGKey(0)
    k_params, k_x = jax.random.split(key)

    batch, obs_dim, hidden, action_dim = 8, 16, 32, 4
    params = init_params(k_params, obs_dim, action_dim, hidden)
    kparams = prepare_params(params)   # pad + bf16-cast once, reuse every call
    x = jax.random.normal(k_x, (batch, obs_dim), jnp.float32)

    out = jax.block_until_ready(network_forward(x, kparams))
    ref = network_forward_ref(x, params)

    assert out.shape == (batch, action_dim)
    # bf16 matmul operands + approx reciprocal + bf16 output store -> loosened tolerance
    assert jnp.allclose(out, ref, atol=3e-2, rtol=3e-2), float(jnp.max(jnp.abs(out - ref)))

    print("KERNEL_OK")
</pallas_src>

<mosaic_0001>
module attributes {stable_mosaic.version = 11 : i64} {
  func.func @_mlp_kernel(%arg0: i32, %arg1: memref<16x16xf32, #tpu.memory_space<vmem>>, %arg2: memref<16x128xbf16, #tpu.memory_space<vmem>>, %arg3: memref<1x128xf32, #tpu.memory_space<vmem>>, %arg4: memref<128x128xbf16, #tpu.memory_space<vmem>>, %arg5: memref<1x128xf32, #tpu.memory_space<vmem>>, %arg6: memref<128x128xbf16, #tpu.memory_space<vmem>>, %arg7: memref<1x128xf32, #tpu.memory_space<vmem>>, %arg8: memref<16x128xbf16, #tpu.memory_space<vmem>>) attributes {dimension_semantics = [#tpu.dimension_semantics<parallel>], iteration_bounds = array<i64: 1>, scalar_prefetch = 0 : i64, scratch_operands = 0 : i64, tpu.core_type = #tpu.core_type<tc>, window_params = [{transform_indices = @transform_0, window_bounds = array<i64: 16, 16>}, {pipeline_mode = #tpu.pipeline_mode<synchronous>, transform_indices = @transform_1, window_bounds = array<i64: 16, 128>}, {pipeline_mode = #tpu.pipeline_mode<synchronous>, transform_indices = @transform_2, window_bounds = array<i64: 1, 128>}, {pipeline_mode = #tpu.pipeline_mode<synchronous>, transform_indices = @transform_3, window_bounds = array<i64: 128, 128>}, {pipeline_mode = #tpu.pipeline_mode<synchronous>, transform_indices = @transform_4, window_bounds = array<i64: 1, 128>}, {pipeline_mode = #tpu.pipeline_mode<synchronous>, transform_indices = @transform_5, window_bounds = array<i64: 128, 128>}, {pipeline_mode = #tpu.pipeline_mode<synchronous>, transform_indices = @transform_6, window_bounds = array<i64: 1, 128>}, {transform_indices = @transform_7, window_bounds = array<i64: 16, 128>}]} {
    %c0 = arith.constant 0 : index
    %c0_0 = arith.constant 0 : index
    %0 = vector.load %arg1[%c0, %c0_0] : memref<16x16xf32, #tpu.memory_space<vmem>>, vector<16x16xf32>
    %1 = arith.truncf %0 : vector<16x16xf32> to vector<16x16xbf16>
    %c0_1 = arith.constant 0 : index
    %c0_2 = arith.constant 0 : index
    %2 = vector.load %arg2[%c0_1, %c0_2] : memref<16x128xbf16, #tpu.memory_space<vmem>>, vector<16x128xbf16>
    %cst = arith.constant dense<0.000000e+00> : vector<16x128xf32>
    %3 = tpu.matmul %1, %2, %cst {dimension_numbers = #tpu.dot_dimension_numbers<[1], [0], [0], [1], [0, 0, 1, 1], [], []>} : vector<16x16xbf16>, vector<16x128xbf16>, vector<16x128xf32> -> vector<16x128xf32>
    %c0_3 = arith.constant 0 : index
    %c0_4 = arith.constant 0 : index
    %4 = vector.load %arg3[%c0_3, %c0_4] : memref<1x128xf32, #tpu.memory_space<vmem>>, vector<1x128xf32>
    %5 = vector.broadcast %4 : vector<1x128xf32> to vector<16x128xf32>
    %6 = arith.addf %3, %5 : vector<16x128xf32>
    %cst_5 = arith.constant 2.000000e+01 : f32
    %7 = vector.broadcast %cst_5 : f32 to vector<16x128xf32>
    %8 = arith.minimumf %6, %7 : vector<16x128xf32>
    %9 = math.exp %8 : vector<16x128xf32>
    %cst_6 = arith.constant 2.000000e+00 : f32
    %10 = vector.broadcast %cst_6 : f32 to vector<16x128xf32>
    %11 = arith.addf %9, %10 : vector<16x128xf32>
    %12 = arith.mulf %9, %11 : vector<16x128xf32>
    %13 = arith.mulf %6, %12 : vector<16x128xf32>
    %cst_7 = arith.constant 2.000000e+00 : f32
    %14 = vector.broadcast %cst_7 : f32 to vector<16x128xf32>
    %15 = arith.addf %12, %14 : vector<16x128xf32>
    %16 = tpu.reciprocal %15 {approx = true} : vector<16x128xf32> -> vector<16x128xf32>
    %17 = arith.mulf %13, %16 : vector<16x128xf32>
    %cst_8 = arith.constant 2.000000e+01 : f32
    %18 = vector.broadcast %cst_8 : f32 to vector<16x128xf32>
    %19 = arith.cmpf ogt, %6, %18 : vector<16x128xf32>
    %20 = arith.select %19, %6, %17 : vector<16x128xi1>, vector<16x128xf32>
    %21 = arith.truncf %20 : vector<16x128xf32> to vector<16x128xbf16>
    %c0_9 = arith.constant 0 : index
    %c0_10 = arith.constant 0 : index
    %22 = vector.load %arg4[%c0_9, %c0_10] : memref<128x128xbf16, #tpu.memory_space<vmem>>, vector<128x128xbf16>
    %cst_11 = arith.constant dense<0.000000e+00> : vector<16x128xf32>
    %23 = tpu.matmul %21, %22, %cst_11 {dimension_numbers = #tpu.dot_dimension_numbers<[1], [0], [0], [1], [0, 0, 1, 1], [], []>} : vector<16x128xbf16>, vector<128x128xbf16>, vector<16x128xf32> -> vector<16x128xf32>
    %c0_12 = arith.constant 0 : index
    %c0_13 = arith.constant 0 : index
    %24 = vector.load %arg5[%c0_12, %c0_13] : memref<1x128xf32, #tpu.memory_space<vmem>>, vector<1x128xf32>
    %25 = vector.broadcast %24 : vector<1x128xf32> to vector<16x128xf32>
    %26 = arith.addf %23, %25 : vector<16x128xf32>
    %cst_14 = arith.constant 2.000000e+01 : f32
    %27 = vector.broadcast %cst_14 : f32 to vector<16x128xf32>
    %28 = arith.minimumf %26, %27 : vector<16x128xf32>
    %29 = math.exp %28 : vector<16x128xf32>
    %cst_15 = arith.constant 2.000000e+00 : f32
    %30 = vector.broadcast %cst_15 : f32 to vector<16x128xf32>
    %31 = arith.addf %29, %30 : vector<16x128xf32>
    %32 = arith.mulf %29, %31 : vector<16x128xf32>
    %33 = arith.mulf %26, %32 : vector<16x128xf32>
    %cst_16 = arith.constant 2.000000e+00 : f32
    %34 = vector.broadcast %cst_16 : f32 to vector<16x128xf32>
    %35 = arith.addf %32, %34 : vector<16x128xf32>
    %36 = tpu.reciprocal %35 {approx = true} : vector<16x128xf32> -> vector<16x128xf32>
    %37 = arith.mulf %33, %36 : vector<16x128xf32>
    %cst_17 = arith.constant 2.000000e+01 : f32
    %38 = vector.broadcast %cst_17 : f32 to vector<16x128xf32>
    %39 = arith.cmpf ogt, %26, %38 : vector<16x128xf32>
    %40 = arith.select %39, %26, %37 : vector<16x128xi1>, vector<16x128xf32>
    %41 = arith.truncf %40 : vector<16x128xf32> to vector<16x128xbf16>
    %c0_18 = arith.constant 0 : index
    %c0_19 = arith.constant 0 : index
    %42 = vector.load %arg6[%c0_18, %c0_19] : memref<128x128xbf16, #tpu.memory_space<vmem>>, vector<128x128xbf16>
    %cst_20 = arith.constant dense<0.000000e+00> : vector<16x128xf32>
    %43 = tpu.matmul %41, %42, %cst_20 {dimension_numbers = #tpu.dot_dimension_numbers<[1], [0], [0], [1], [0, 0, 1, 1], [], []>} : vector<16x128xbf16>, vector<128x128xbf16>, vector<16x128xf32> -> vector<16x128xf32>
    %c0_21 = arith.constant 0 : index
    %c0_22 = arith.constant 0 : index
    %44 = vector.load %arg7[%c0_21, %c0_22] : memref<1x128xf32, #tpu.memory_space<vmem>>, vector<1x128xf32>
    %45 = vector.broadcast %44 : vector<1x128xf32> to vector<16x128xf32>
    %46 = arith.addf %43, %45 : vector<16x128xf32>
    %47 = arith.truncf %46 : vector<16x128xf32> to vector<16x128xbf16>
    %c0_23 = arith.constant 0 : index
    %c0_24 = arith.constant 0 : index
    %48 = vector.load %arg8[%c0_23, %c0_24] : memref<16x128xbf16, #tpu.memory_space<vmem>>, vector<16x128xbf16>
    tpu.vector_store %arg8[%c0_23, %c0_24], %47 {strides = array<i32>} : memref<16x128xbf16, #tpu.memory_space<vmem>>, vector<16x128xbf16>,
    return
  }
  func.func @transform_0(%arg0: i32) -> (i32, i32) {
    %c0_i32 = arith.constant 0 : i32
    %c0_i32_0 = arith.constant 0 : i32
    return %arg0, %c0_i32 : i32, i32
  }
  func.func @transform_1(%arg0: i32) -> (i32, i32) {
    %c0_i32 = arith.constant 0 : i32
    %c0_i32_0 = arith.constant 0 : i32
    %c0_i32_1 = arith.constant 0 : i32
    return %c0_i32, %c0_i32_0 : i32, i32
  }
  func.func @transform_2(%arg0: i32) -> (i32, i32) {
    %c0_i32 = arith.constant 0 : i32
    %c0_i32_0 = arith.constant 0 : i32
    %c0_i32_1 = arith.constant 0 : i32
    return %c0_i32, %c0_i32_0 : i32, i32
  }
  func.func @transform_3(%arg0: i32) -> (i32, i32) {
    %c0_i32 = arith.constant 0 : i32
    %c0_i32_0 = arith.constant 0 : i32
    %c0_i32_1 = arith.constant 0 : i32
    return %c0_i32, %c0_i32_0 : i32, i32
  }
  func.func @transform_4(%arg0: i32) -> (i32, i32) {
    %c0_i32 = arith.constant 0 : i32
    %c0_i32_0 = arith.constant 0 : i32
    %c0_i32_1 = arith.constant 0 : i32
    return %c0_i32, %c0_i32_0 : i32, i32
  }
  func.func @transform_5(%arg0: i32) -> (i32, i32) {
    %c0_i32 = arith.constant 0 : i32
    %c0_i32_0 = arith.constant 0 : i32
    %c0_i32_1 = arith.constant 0 : i32
    return %c0_i32, %c0_i32_0 : i32, i32
  }
  func.func @transform_6(%arg0: i32) -> (i32, i32) {
    %c0_i32 = arith.constant 0 : i32
    %c0_i32_0 = arith.constant 0 : i32
    %c0_i32_1 = arith.constant 0 : i32
    return %c0_i32, %c0_i32_0 : i32, i32
  }
  func.func @transform_7(%arg0: i32) -> (i32, i32) {
    %c0_i32 = arith.constant 0 : i32
    %c0_i32_0 = arith.constant 0 : i32
    return %arg0, %c0_i32 : i32, i32
  }
}

</mosaic_0001>

<llo_original>
// kernel: tpu_custom_call.1
$region0: #{tpu_custom_call.1}
  #allocation0 [shape = 'u32[]', space=smem, size = 0x4, offset = 0x4, fixed_abs, tag = 'smem constant byte address 0x4 - core index']
  #allocation1 [shape = 'u32[144,128]{1,0:T(1,128)}', space=vmem, size = 0x12000, scoped, tag = 'internal scratch']
  %s0 = inlined_call_operand.hbm [shape: f32[16,16], index: 0, kind: input, shape index: {}]
  %s1 = inlined_call_operand.hbm [shape: bf16[16,128], index: 1, kind: input, shape index: {}]
  %s2 = inlined_call_operand.vmem [shape: f32[1,128], index: 2, kind: input, shape index: {}]
  %s3 = inlined_call_operand.hbm [shape: bf16[128,128], index: 3, kind: input, shape index: {}]
  %s4 = inlined_call_operand.vmem [shape: f32[1,128], index: 4, kind: input, shape index: {}]
  %s5 = inlined_call_operand.hbm [shape: bf16[128,128], index: 5, kind: input, shape index: {}]
  %s6 = inlined_call_operand.vmem [shape: f32[1,128], index: 6, kind: input, shape index: {}]
  %s7 = inlined_call_operand.hbm [shape: bf16[16,128], index: 7, kind: output, shape index: {}]
  %s8 = sld [smem:[#allocation0]]
  $region54: #{tpu_custom_call.1} parent=0
    _
  %s10 = ssub.s32 1, %s8
  %s11 = scalar_select 0, %s10, %s8
  $region1: #{tpu_custom_call.1} parent=0
    #allocation2 [shape = 'u8[8192]{0}', space=vmem, size = 0x2000, scoped, tag = 'input window, operand 0, single buffered']
    #allocation3 [shape = 's32[1]{0}', space=sflag, size = 0x4, scoped, tag = 'scoped memory for tpu_custom_call.1']
    #allocation4 [shape = 's32[1]{0}', space=sflag, size = 0x4, scoped, tag = 'scoped memory for tpu_custom_call.1']
    #allocation5 [shape = 'u8[4096]{0}', space=vmem, size = 0x1000, scoped, tag = 'input window, operand 1, single buffered']
    #allocation6 [shape = 's32[1]{0}', space=sflag, size = 0x4, scoped, tag = 'scoped memory for tpu_custom_call.1']
    #allocation7 [shape = 'u8[32768]{0}', space=vmem, size = 0x8000, scoped, tag = 'input window, operand 3, single buffered']
    #allocation8 [shape = 'u8[32768]{0}', space=vmem, size = 0x8000, scoped, tag = 'input window, operand 5, single buffered']
    #allocation9 [shape = 's32[1]{0}', space=sflag, size = 0x4, scoped, tag = 'scoped memory for tpu_custom_call.1']
    #allocation10 [shape = 'u8[4096]{0}', space=vmem, size = 0x1000, scoped, tag = 'output window, operand 0, single buffered']
    %12 = vsyncpa [#allocation3], 0
    %13 = vsyncpa [#allocation6], 0
    %14 = vsyncpa [#allocation9], 0
    %15 = vsyncpa [#allocation4], 0
    // Predicated region
    $region2: #{tpu_custom_call.1} parent=1 // pred_check
      _
    $region3: #{tpu_custom_call.1} parent=1 // pred_check_branch
      %17 = sbr.rel (0) target = $region5
    $region4: #{tpu_custom_call.1} parent=1 // pred_region
      %s19 = ssub.s32 256, 256
      %20 = vsyncadd [#allocation3], %s19
      %s21 = sshll.u32 [#allocation2], 4
      %s22 = int_to_ptr.vmem [resolvable:$true] %s21
      %27 = dma.hbm_to_vmem [thread:$0]  %s0, 256, %s22, [#allocation3], 128, 128, 8
    $region5: #{tpu_custom_call.1} parent=1 // pred_fallthru
      _
    // Predicated region
    $region6: #{tpu_custom_call.1} parent=1 // pred_check
      _
    $region7: #{tpu_custom_call.1} parent=1 // pred_check_branch
      %29 = sbr.rel (0) target = $region9
    $region8: #{tpu_custom_call.1} parent=1 // pred_region
      %s31 = ssub.s32 128, 128
      %32 = vsyncadd [#allocation6], %s31
      %s33 = sshll.u32 [#allocation5], 4
      %s34 = int_to_ptr.vmem [resolvable:$true] %s33
      %39 = dma.hbm_to_vmem [thread:$0]  %s1, 128, %s34, [#allocation6], 64, 64, 4
    $region9: #{tpu_custom_call.1} parent=1 // pred_fallthru
      _
    // Predicated region
    $region10: #{tpu_custom_call.1} parent=1 // pred_check
      _
    $region11: #{tpu_custom_call.1} parent=1 // pred_check_branch
      %41 = sbr.rel (0) target = $region13
    $region12: #{tpu_custom_call.1} parent=1 // pred_region
      _
    $region13: #{tpu_custom_call.1} parent=1 // pred_fallthru
      _
    // Predicated region
    $region14: #{tpu_custom_call.1} parent=1 // pred_check
      _
    $region15: #{tpu_custom_call.1} parent=1 // pred_check_branch
      %43 = sbr.rel (0) target = $region17
    $region16: #{tpu_custom_call.1} parent=1 // pred_region
      %s45 = ssub.s32 1024, 1024
      %46 = vsyncadd [#allocation6], %s45
      %s47 = sshll.u32 [#allocation7], 4
      %s48 = int_to_ptr.vmem [resolvable:$true] %s47
      %53 = dma.hbm_to_vmem [thread:$0]  %s3, 1024, %s48, [#allocation6], 64, 64, 4
    $region17: #{tpu_custom_call.1} parent=1 // pred_fallthru
      _
    // Predicated region
    $region18: #{tpu_custom_call.1} parent=1 // pred_check
      _
    $region19: #{tpu_custom_call.1} parent=1 // pred_check_branch
      %55 = sbr.rel (0) target = $region21
    $region20: #{tpu_custom_call.1} parent=1 // pred_region
      _
    $region21: #{tpu_custom_call.1} parent=1 // pred_fallthru
      _
    // Predicated region
    $region22: #{tpu_custom_call.1} parent=1 // pred_check
      _
    $region23: #{tpu_custom_call.1} parent=1 // pred_check_branch
      %57 = sbr.rel (0) target = $region25
    $region24: #{tpu_custom_call.1} parent=1 // pred_region
      %s59 = ssub.s32 1024, 1024
      %60 = vsyncadd [#allocation9], %s59
      %s61 = sshll.u32 [#allocation8], 4
      %s62 = int_to_ptr.vmem [resolvable:$true] %s61
      %67 = dma.hbm_to_vmem [thread:$0]  %s5, 1024, %s62, [#allocation9], 64, 64, 4
    $region25: #{tpu_custom_call.1} parent=1 // pred_fallthru
      _
    // Predicated region
    $region26: #{tpu_custom_call.1} parent=1 // pred_check
      _
    $region27: #{tpu_custom_call.1} parent=1 // pred_check_branch
      %69 = sbr.rel (0) target = $region29
    $region28: #{tpu_custom_call.1} parent=1 // pred_region
      _
    $region29: #{tpu_custom_call.1} parent=1 // pred_fallthru
      _
    // Predicated region
    $region30: #{tpu_custom_call.1} parent=1 // pred_check
      _
    $region31: #{tpu_custom_call.1} parent=1 // pred_check_branch
      %71 = sbr.rel (0) target = $region33
    $region32: #{tpu_custom_call.1} parent=1 // pred_region
      %72 = dma.done [#allocation3], 256
    $region33: #{tpu_custom_call.1} parent=1 // pred_fallthru
      _
    // Predicated region
    $region34: #{tpu_custom_call.1} parent=1 // pred_check
      _
    $region35: #{tpu_custom_call.1} parent=1 // pred_check_branch
      %74 = sbr.rel (0) target = $region37
    $region36: #{tpu_custom_call.1} parent=1 // pred_region
      %75 = dma.done [#allocation6], 128
    $region37: #{tpu_custom_call.1} parent=1 // pred_fallthru
      _
    // Predicated region
    $region38: #{tpu_custom_call.1} parent=1 // pred_check
      _
    $region39: #{tpu_custom_call.1} parent=1 // pred_check_branch
      %77 = sbr.rel (0) target = $region41
    $region40: #{tpu_custom_call.1} parent=1 // pred_region
      %78 = dma.done [#allocation6], 1024
    $region41: #{tpu_custom_call.1} parent=1 // pred_fallthru
      _
    // Predicated region
    $region42: #{tpu_custom_call.1} parent=1 // pred_check
      _
    $region43: #{tpu_custom_call.1} parent=1 // pred_check_branch
      %80 = sbr.rel (0) target = $region45
    $region44: #{tpu_custom_call.1} parent=1 // pred_region
      %81 = dma.done [#allocation9], 1024
    $region45: #{tpu_custom_call.1} parent=1 // pred_fallthru
      _
    %v83 = vld [vmem:[#allocation2] sm:$0xff]
    %v84 = vld [vmem:[#allocation2 + $0x8] sm:$0xff]
    %v85 = vpack.c.bf16 %v84, %v83
    %v86 = vld [vmem:[#allocation5] sm:$0xf]
    %v87 = vld [vmem:[#allocation5 + $0x4] sm:$0xf]
    %v88 = vld [vmem:[%s2] sm:$0x1]
    %v90 = vlaneseq
    %v91 = vshrl.u32 %v90, 7
    %v92 = vsub.s32 0, %v91
    %v93 = vrot.slane %v88, %v92
    %v97 = vunpack.c.l.b16 %v86
    %v98 = vunpack.c.l.b16 %v87
    %v99 = vpack.c.b16 %v98, %v97
    %vm101 = vcmask 130048
    %v103 = vsel %vm101, %v85, 0
    %105 = vmatprep.subr.bf16.mxu0 0
    %106 = vmatpush1.bf16.msra.mxu0 %v99
    %107 = vmatprep.subr.bf16.mxu0 0
    %108 = vmatpush1.bf16.msra.mxu0 0
    %109 = vmatprep.subr.bf16.mxu0 0
    %110 = vmatpush1.bf16.msra.mxu0 0
    %111 = vmatprep.subr.bf16.mxu0 0
    %112 = vmatpush1.bf16.msra.mxu0 0
    %113 = vmatprep.subr.bf16.mxu0 0
    %114 = vmatpush1.bf16.msra.mxu0 0
    %115 = vmatprep.subr.bf16.mxu0 0
    %116 = vmatpush1.bf16.msra.mxu0 0
    %117 = vmatprep.subr.bf16.mxu0 0
    %118 = vmatpush1.bf16.msra.mxu0 0
    %119 = vmatprep.subr.bf16.mxu0 0
    %120 = vmatpush1.bf16.msra.mxu0 0
    %121 = vmatprep.subr.bf16.mxu0 0
    %122 = vmatpush1.bf16.msra.mxu0 0
    %123 = vmatprep.subr.bf16.mxu0 0
    %124 = vmatpush1.bf16.msra.mxu0 0
    %125 = vmatprep.subr.bf16.mxu0 0
    %126 = vmatpush1.bf16.msra.mxu0 0
    %127 = vmatprep.subr.bf16.mxu0 0
    %128 = vmatpush1.bf16.msra.mxu0 0
    %129 = vmatprep.subr.bf16.mxu0 0
    %130 = vmatpush1.bf16.msra.mxu0 0
    %131 = vmatprep.subr.bf16.mxu0 0
    %132 = vmatpush1.bf16.msra.mxu0 0
    %133 = vmatprep.subr.bf16.mxu0 0
    %134 = vmatpush1.bf16.msra.mxu0 0
    %135 = vmatprep.subr.bf16.mxu0 0
    %136 = vmatpush1.bf16.msra.mxu0 0
    %137 = vmatprep.mubr.bf16.mxu0 0
    %138 = vmatmul.mubr.bf16.gmra.mrb[0].mxu0 %v103
    %v139 = vpop.f32.mrb[0].mxu0
    %v140 = vadd.f32 %v93, %v139
    %v141 = vpop.f32.mrb[0].mxu0
    %v142 = vpop.f32.mrb[0].mxu0
    %v143 = vadd.f32 %v93, %v142
    %v144 = vpop.f32.mrb[0].mxu0
    %145 = vdwg.mxu0
    %v146 = vmin.f32 %v140, 20.0
    %v147 = vmin.f32 %v143, 20.0
    %v148 = vmul.f32 %v146, 1.442695
    %v149 = vpow.pop %v148
    %v150 = vmul.f32 %v147, 1.442695
    %v151 = vpow.pop %v150
    %v152 = vadd.f32 %v149, 2.0
    %v153 = vadd.f32 %v151, 2.0
    %v154 = vmul.f32 %v149, %v152
    %v155 = vmul.f32 %v151, %v153
    %v156 = vmul.f32 %v140, %v154
    %v157 = vmul.f32 %v143, %v155
    %v158 = vadd.f32 %v154, 2.0
    %v159 = vadd.f32 %v155, 2.0
    %v160 = vrcp.pop %v158
    %v161 = vrcp.pop %v159
    %v162 = vmul.f32 %v156, %v160
    %v163 = vmul.f32 %v157, %v161
    %vm164 = vcmp.gt.f32.partialorder %v140, 20.0
    %vm165 = vcmp.gt.f32.partialorder %v143, 20.0
    %v166 = vsel %vm164, %v140, %v162
    %v167 = vsel %vm165, %v143, %v163
    %v168 = vpack.c.bf16 %v167, %v166
    %v169 = vld [vmem:[#allocation7] sm:$0xf]
    %v170 = vld [vmem:[#allocation7 + $0x4] sm:$0xf]
    %v171 = vld [vmem:[#allocation7 + $0x8] sm:$0xf]
    %v172 = vld [vmem:[#allocation7 + $0xc] sm:$0xf]
    %v173 = vld [vmem:[#allocation7 + $0x10] sm:$0xf]
    %v174 = vld [vmem:[#allocation7 + $0x14] sm:$0xf]
    %v175 = vld [vmem:[#allocation7 + $0x18] sm:$0xf]
    %v176 = vld [vmem:[#allocation7 + $0x1c] sm:$0xf]
    %v177 = vld [vmem:[#allocation7 + $0x20] sm:$0xf]
    %v178 = vld [vmem:[#allocation7 + $0x24] sm:$0xf]
    %v179 = vld [vmem:[#allocation7 + $0x28] sm:$0xf]
    %v180 = vld [vmem:[#allocation7 + $0x2c] sm:$0xf]
    %v181 = vld [vmem:[#allocation7 + $0x30] sm:$0xf]
    %v182 = vld [vmem:[#allocation7 + $0x34] sm:$0xf]
    %v183 = vld [vmem:[#allocation7 + $0x38] sm:$0xf]
    %v184 = vld [vmem:[#allocation7 + $0x3c] sm:$0xf]
    %v185 = vld [vmem:[%s4] sm:$0x1]
    %v187 = vlaneseq
    %v188 = vshrl.u32 %v187, 7
    %v189 = vsub.s32 0, %v188
    %v190 = vrot.slane %v185, %v189
    %v208 = vunpack.c.l.b16 %v169
    %v209 = vunpack.c.l.b16 %v170
    %v210 = vunpack.c.l.b16 %v171
    %v211 = vunpack.c.l.b16 %v172
    %v212 = vunpack.c.l.b16 %v173
    %v213 = vunpack.c.l.b16 %v174
    %v214 = vunpack.c.l.b16 %v175
    %v215 = vunpack.c.l.b16 %v176
    %v216 = vunpack.c.l.b16 %v177
    %v217 = vunpack.c.l.b16 %v178
    %v218 = vunpack.c.l.b16 %v179
    %v219 = vunpack.c.l.b16 %v180
    %v220 = vunpack.c.l.b16 %v181
    %v221 = vunpack.c.l.b16 %v182
    %v222 = vunpack.c.l.b16 %v183
    %v223 = vunpack.c.l.b16 %v184
    %v224 = vpack.c.b16 %v209, %v208
    %v225 = vpack.c.b16 %v211, %v210
    %v226 = vpack.c.b16 %v213, %v212
    %v227 = vpack.c.b16 %v215, %v214
    %v228 = vpack.c.b16 %v217, %v216
    %v229 = vpack.c.b16 %v219, %v218
    %v230 = vpack.c.b16 %v221, %v220
    %v231 = vpack.c.b16 %v223, %v222
    %240 = vmatprep.subr.bf16.mxu0 0
    %241 = vmatpush1.bf16.msra.mxu0 %v224
    %242 = vmatprep.subr.bf16.mxu0 0
    %243 = vmatpush1.bf16.msra.mxu0 %v225
    %244 = vmatprep.subr.bf16.mxu0 0
    %245 = vmatpush1.bf16.msra.mxu0 %v226
    %246 = vmatprep.subr.bf16.mxu0 0
    %247 = vmatpush1.bf16.msra.mxu0 %v227
    %248 = vmatprep.subr.bf16.mxu0 0
    %249 = vmatpush1.bf16.msra.mxu0 %v228
    %250 = vmatprep.subr.bf16.mxu0 0
    %251 = vmatpush1.bf16.msra.mxu0 %v229
    %252 = vmatprep.subr.bf16.mxu0 0
    %253 = vmatpush1.bf16.msra.mxu0 %v230
    %254 = vmatprep.subr.bf16.mxu0 0
    %255 = vmatpush1.bf16.msra.mxu0 %v231
    %256 = vmatprep.subr.bf16.mxu0 0
    %257 = vmatpush1.bf16.msra.mxu0 0
    %258 = vmatprep.subr.bf16.mxu0 0
    %259 = vmatpush1.bf16.msra.mxu0 0
    %260 = vmatprep.subr.bf16.mxu0 0
    %261 = vmatpush1.bf16.msra.mxu0 0
    %262 = vmatprep.subr.bf16.mxu0 0
    %263 = vmatpush1.bf16.msra.mxu0 0
    %264 = vmatprep.subr.bf16.mxu0 0
    %265 = vmatpush1.bf16.msra.mxu0 0
    %266 = vmatprep.subr.bf16.mxu0 0
    %267 = vmatpush1.bf16.msra.mxu0 0
    %268 = vmatprep.subr.bf16.mxu0 0
    %269 = vmatpush1.bf16.msra.mxu0 0
    %270 = vmatprep.subr.bf16.mxu0 0
    %271 = vmatpush1.bf16.msra.mxu0 0
    %272 = vmatprep.mubr.bf16.mxu0 0
    %273 = vmatmul.mubr.bf16.gmra.mrb[0].mxu0 %v168
    %v274 = vpop.f32.mrb[0].mxu0
    %v275 = vadd.f32 %v190, %v274
    %v276 = vpop.f32.mrb[0].mxu0
    %v277 = vpop.f32.mrb[0].mxu0
    %v278 = vadd.f32 %v190, %v277
    %v279 = vpop.f32.mrb[0].mxu0
    %280 = vdwg.mxu0
    %v281 = vmin.f32 %v275, 20.0
    %v282 = vmin.f32 %v278, 20.0
    %v283 = vmul.f32 %v281, 1.442695
    %v284 = vpow.pop %v283
    %v285 = vmul.f32 %v282, 1.442695
    %v286 = vpow.pop %v285
    %v287 = vadd.f32 %v284, 2.0
    %v288 = vadd.f32 %v286, 2.0
    %v289 = vmul.f32 %v284, %v287
    %v290 = vmul.f32 %v286, %v288
    %v291 = vmul.f32 %v275, %v289
    %v292 = vmul.f32 %v278, %v290
    %v293 = vadd.f32 %v289, 2.0
    %v294 = vadd.f32 %v290, 2.0
    %v295 = vrcp.pop %v293
    %v296 = vrcp.pop %v294
    %v297 = vmul.f32 %v291, %v295
    %v298 = vmul.f32 %v292, %v296
    %vm299 = vcmp.gt.f32.partialorder %v275, 20.0
    %vm300 = vcmp.gt.f32.partialorder %v278, 20.0
    %v301 = vsel %vm299, %v275, %v297
    %v302 = vsel %vm300, %v278, %v298
    %v303 = vpack.c.bf16 %v302, %v301
    %v304 = vld [vmem:[#allocation8] sm:$0xf]
    %v305 = vld [vmem:[#allocation8 + $0x4] sm:$0xf]
    %v306 = vld [vmem:[#allocation8 + $0x8] sm:$0xf]
    %v307 = vld [vmem:[#allocation8 + $0xc] sm:$0xf]
    %v308 = vld [vmem:[#allocation8 + $0x10] sm:$0xf]
    %v309 = vld [vmem:[#allocation8 + $0x14] sm:$0xf]
    %v310 = vld [vmem:[#allocation8 + $0x18] sm:$0xf]
    %v311 = vld [vmem:[#allocation8 + $0x1c] sm:$0xf]
    %v312 = vld [vmem:[#allocation8 + $0x20] sm:$0xf]
    %v313 = vld [vmem:[#allocation8 + $0x24] sm:$0xf]
    %v314 = vld [vmem:[#allocation8 + $0x28] sm:$0xf]
    %v315 = vld [vmem:[#allocation8 + $0x2c] sm:$0xf]
    %v316 = vld [vmem:[#allocation8 + $0x30] sm:$0xf]
    %v317 = vld [vmem:[#allocation8 + $0x34] sm:$0xf]
    %v318 = vld [vmem:[#allocation8 + $0x38] sm:$0xf]
    %v319 = vld [vmem:[#allocation8 + $0x3c] sm:$0xf]
    %v320 = vld [vmem:[%s6] sm:$0x1]
    %v322 = vlaneseq
    %v323 = vshrl.u32 %v322, 7
    %v324 = vsub.s32 0, %v323
    %v325 = vrot.slane %v320, %v324
    %v343 = vunpack.c.l.b16 %v304
    %v344 = vunpack.c.l.b16 %v305
    %v345 = vunpack.c.l.b16 %v306
    %v346 = vunpack.c.l.b16 %v307
    %v347 = vunpack.c.l.b16 %v308
    %v348 = vunpack.c.l.b16 %v309
    %v349 = vunpack.c.l.b16 %v310
    %v350 = vunpack.c.l.b16 %v311
    %v351 = vunpack.c.l.b16 %v312
    %v352 = vunpack.c.l.b16 %v313
    %v353 = vunpack.c.l.b16 %v314
    %v354 = vunpack.c.l.b16 %v315
    %v355 = vunpack.c.l.b16 %v316
    %v356 = vunpack.c.l.b16 %v317
    %v357 = vunpack.c.l.b16 %v318
    %v358 = vunpack.c.l.b16 %v319
    %v359 = vpack.c.b16 %v344, %v343
    %v360 = vpack.c.b16 %v346, %v345
    %v361 = vpack.c.b16 %v348, %v347
    %v362 = vpack.c.b16 %v350, %v349
    %v363 = vpack.c.b16 %v352, %v351
    %v364 = vpack.c.b16 %v354, %v353
    %v365 = vpack.c.b16 %v356, %v355
    %v366 = vpack.c.b16 %v358, %v357
    %375 = vmatprep.subr.bf16.mxu0 0
    %376 = vmatpush1.bf16.msra.mxu0 %v359
    %377 = vmatprep.subr.bf16.mxu0 0
    %378 = vmatpush1.bf16.msra.mxu0 %v360
    %379 = vmatprep.subr.bf16.mxu0 0
    %380 = vmatpush1.bf16.msra.mxu0 %v361
    %381 = vmatprep.subr.bf16.mxu0 0
    %382 = vmatpush1.bf16.msra.mxu0 %v362
    %383 = vmatprep.subr.bf16.mxu0 0
    %384 = vmatpush1.bf16.msra.mxu0 %v363
    %385 = vmatprep.subr.bf16.mxu0 0
    %386 = vmatpush1.bf16.msra.mxu0 %v364
    %387 = vmatprep.subr.bf16.mxu0 0
    %388 = vmatpush1.bf16.msra.mxu0 %v365
    %389 = vmatprep.subr.bf16.mxu0 0
    %390 = vmatpush1.bf16.msra.mxu0 %v366
    %391 = vmatprep.subr.bf16.mxu0 0
    %392 = vmatpush1.bf16.msra.mxu0 0
    %393 = vmatprep.subr.bf16.mxu0 0
    %394 = vmatpush1.bf16.msra.mxu0 0
    %395 = vmatprep.subr.bf16.mxu0 0
    %396 = vmatpush1.bf16.msra.mxu0 0
    %397 = vmatprep.subr.bf16.mxu0 0
    %398 = vmatpush1.bf16.msra.mxu0 0
    %399 = vmatprep.subr.bf16.mxu0 0
    %400 = vmatpush1.bf16.msra.mxu0 0
    %401 = vmatprep.subr.bf16.mxu0 0
    %402 = vmatpush1.bf16.msra.mxu0 0
    %403 = vmatprep.subr.bf16.mxu0 0
    %404 = vmatpush1.bf16.msra.mxu0 0
    %405 = vmatprep.subr.bf16.mxu0 0
    %406 = vmatpush1.bf16.msra.mxu0 0
    %407 = vmatprep.mubr.bf16.mxu0 0
    %408 = vmatmul.mubr.bf16.gmra.mrb[0].mxu0 %v303
    %v409 = vpop.f32.mrb[0].mxu0
    %v410 = vadd.f32 %v325, %v409
    %v411 = vpop.f32.mrb[0].mxu0
    %v412 = vpop.f32.mrb[0].mxu0
    %v413 = vadd.f32 %v325, %v412
    %v414 = vpop.f32.mrb[0].mxu0
    %415 = vdwg.mxu0
    %v416 = vpack.c.bf16 %v413, %v410
    %v418 = vunpack.c.l.b16 %v416
    %v419 = vunpack.c.h.b16 %v416
    %v420 = vpack.c.b16 %v418, %v418
    %v421 = vpack.c.b16 %v419, %v419
    %424 = vst [vmem:[#allocation10] sm:$0xf] %v420
    %425 = vst [vmem:[#allocation10 + $0x4] sm:$0xf] %v421
    // Predicated region
    $region46: #{tpu_custom_call.1} parent=1 // pred_check
      _
    $region47: #{tpu_custom_call.1} parent=1 // pred_check_branch
      %427 = sbr.rel (0) target = $region49
    $region48: #{tpu_custom_call.1} parent=1 // pred_region
      %s429 = ssub.s32 128, 128
      %430 = vsyncadd [#allocation4], %s429
      %s431 = sshll.u32 [#allocation10], 4
      %s432 = int_to_ptr.vmem [resolvable:$true] %s431
      %437 = dma.vmem_to_hbm [thread:$0]  %s432, 128, %s7, [#allocation4], 64, 64, 4
    $region49: #{tpu_custom_call.1} parent=1 // pred_fallthru
      _
    // Predicated region
    $region50: #{tpu_custom_call.1} parent=1 // pred_check
      _
    $region51: #{tpu_custom_call.1} parent=1 // pred_check_branch
      %439 = sbr.rel (0) target = $region53
    $region52: #{tpu_custom_call.1} parent=1 // pred_region
      %440 = dma.done [#allocation4], 128
    $region53: #{tpu_custom_call.1} parent=1 // pred_fallthru
      _
    %441 = vsyncpa [#allocation3], 1
    %442 = vsyncpa [#allocation6], 1
    %443 = vsyncpa [#allocation9], 1
    %444 = vsyncpa [#allocation4], 1

</llo_original>
